<compile_context>
chip_gen: v5e
topology: v5e:2x2
jax: 0.10.0
libtpu: 0.0.40
codegen_flags: <defaults>
</compile_context>

<pallas_src>
import functools
from math import log10, prod

import jax
import jax.numpy as jnp
from jax import lax
from jax.experimental import pallas as pl
from jax.experimental.pallas import tpu as pltpu

_LANES = 128
_CHUNK_LANES = 8 * _LANES          # per-chunk f32 temporaries stay a few vregs
_MAX_CHUNKS_PER_BLOCK = 64         # static unroll bound (<= 64*1024 lanes/block)
_PER_BUFFER_VMEM = 2 << 20         # ~2 MiB per input DMA buffer (roofline knee)


def _sse_kernel(x_ref, y_ref, o_ref, *, f, block_f, chunk_f, n_k, any_ragged):
    """Accumulate per-image lane-dense (B, 128) partial SSE per feature split."""
    s = pl.program_id(0)           # parallel split of the feature axis
    k = pl.program_id(1)           # reduction over feature blocks

    @pl.when(k == 0)
    def _():
        o_ref[...] = jnp.zeros_like(o_ref)

    b = x_ref.shape[0]
    n_chunks = block_f // chunk_f
    n_fold = chunk_f // _LANES
    # Un-clamped element offset of this block along the per-image feature axis.
    base = (s * n_k + k) * block_f

    def partial(masked):
        if masked:
            lane_idx = lax.broadcasted_iota(jnp.int32, (b, chunk_f), 1)
        acc = jnp.zeros((b, _LANES), jnp.float32)
        # Static unroll: each chunk's f32 temporaries live only a few vregs.
        for c in range(n_chunks):
            lo = c * chunk_f
            xs = x_ref[:, lo:lo + chunk_f].astype(jnp.float32)
            ys = y_ref[:, lo:lo + chunk_f].astype(jnp.float32)
            err = xs - ys
            err2 = err * err
            if masked:
                idx = (base + lo) + lane_idx
                err2 = jnp.where(idx < f, err2, 0.0)   # zero OOB garbage
            # Fold chunk lanes onto 128 lanes with lane-aligned adds (pure VPU;
            # no cross-lane reduce, no reshape).
            folded = err2[:, :_LANES]
            for g in range(1, n_fold):
                folded = folded + err2[:, g * _LANES:(g + 1) * _LANES]
            acc = acc + folded
        return acc

    if any_ragged:
        full = base + block_f <= f

        @pl.when(full)
        def _():
            o_ref[...] += partial(masked=False)

        @pl.when(jnp.logical_not(full))
        def _():
            o_ref[...] += partial(masked=True)
    else:
        o_ref[...] += partial(masked=False)


def _tiling(b, f, itemsize):
    """Pick (block_f, chunk_f, n_k, n_split, n_blocks, any_ragged)."""
    b_pad = -(-b // 8) * 8                                  # sublane padding
    # Lanes per input buffer under the ~2 MiB cap (at least one lane tile).
    lane_quota = max(_LANES, _PER_BUFFER_VMEM // (b_pad * max(itemsize, 1)))
    lane_quota = min(lane_quota, _MAX_CHUNKS_PER_BLOCK * _CHUNK_LANES)
    block_f = min(lane_quota, -(-f // _LANES) * _LANES)
    block_f = max(_LANES, (block_f // _LANES) * _LANES)
    chunk_f = min(_CHUNK_LANES, block_f)
    block_f = (block_f // chunk_f) * chunk_f                # whole chunks
    n_blocks = -(-f // block_f)
    n_split = 2 if n_blocks >= 2 else 1                     # v7x: 2 TCs busy
    n_k = -(-n_blocks // n_split)
    any_ragged = (n_split * n_k * block_f) != f
    return block_f, chunk_f, n_k, n_split, n_blocks, any_ragged


@functools.partial(jax.jit, static_argnames=("peakval",))
def psnr_loss(x, y, peakval=255):
    """Pallas implementation of PSNRLoss.forward(input, other)."""
    assert x.shape == y.shape, "input and other must have the same shape"
    b = x.shape[0]
    f = int(prod(x.shape[1:]))

    itemsize = max(jnp.dtype(x.dtype).itemsize, jnp.dtype(y.dtype).itemsize)
    block_f, chunk_f, n_k, n_split, n_blocks, any_ragged = _tiling(b, f, itemsize)

    x2 = x.reshape(b, f)            # free view; native dtype over HBM
    y2 = y.reshape(b, f)

    kernel = functools.partial(_sse_kernel, f=f, block_f=block_f,
                               chunk_f=chunk_f, n_k=n_k, any_ragged=any_ragged)

    last_block = n_blocks - 1

    def in_map(s, k):
        # Clamp so the DMA of trailing/duplicated blocks stays in bounds; their
        # contribution is fully masked to 0 inside the kernel (un-clamped base).
        return (0, jnp.minimum(s * n_k + k, last_block))

    in_spec = pl.BlockSpec((b, block_f), in_map)

    sse_parts = pl.pallas_call(
        kernel,
        out_shape=jax.ShapeDtypeStruct((n_split, b, _LANES), jnp.float32),
        grid_spec=pltpu.PrefetchScalarGridSpec(
            num_scalar_prefetch=0,
            grid=(n_split, n_k),
            in_specs=[in_spec, in_spec],
            out_specs=pl.BlockSpec((None, b, _LANES), lambda s, k: (s, 0, 0)),
        ),
        compiler_params=pltpu.CompilerParams(
            dimension_semantics=("parallel", "arbitrary"),
            vmem_limit_bytes=32 << 20,
        ),
    )(x2, y2)

    # Tiny final reduce of the (n_split, B, 128) lane partials.
    sse = jnp.sum(sse_parts, axis=(0, 2))                   # (B,)
    mse = sse / jnp.float32(f)                              # divide by true C*H*W
    # NOTE: mse == 0 (identical inputs) gives -inf PSNR, matching the reference
    # semantics of 10*log10(mse).
    psnr = 10.0 * log10(peakval ** 2) - 10.0 * jnp.log10(mse)
    return -(jnp.sum(psnr) / jnp.float32(b))                # scalar, float32


def _reference(x, y, peakval=255):
    """Pure-JAX reference of the same semantics (sanity check)."""
    b = x.shape[0]
    err = (x.astype(jnp.float32) - y.astype(jnp.float32)).reshape(b, -1)
    mse = jnp.mean(err * err, axis=-1)
    psnr = 10.0 * log10(peakval ** 2) - 10.0 * jnp.log10(mse)
    return -jnp.mean(psnr)


if __name__ == "__main__":
    key = jax.random.PRNGKey(0)
    k1, k2 = jax.random.split(key)

    B, C, H, W = 2, 4, 16, 16
    # "Clean" image in [0, 255] and a noisy version of it (NCHW layout).
    x = jax.random.uniform(k1, (B, C, H, W), jnp.float32) * 255.0
    noise = jax.random.normal(k2, (B, C, H, W), jnp.float32) * 5.0
    y = x + noise

    out = psnr_loss(x, y, peakval=255)
    out = jax.block_until_ready(out)

    ref = _reference(x, y, peakval=255)
    assert out.shape == (), f"expected scalar, got {out.shape}"
    assert jnp.allclose(out, ref, rtol=1e-5, atol=1e-5), (out, ref)

    print("KERNEL_OK")
</pallas_src>

<mosaic_0001>
module attributes {stable_mosaic.version = 11 : i64} {
  func.func @_sse_kernel(%arg0: i32, %arg1: i32, %arg2: memref<2x1024xf32, #tpu.memory_space<vmem>>, %arg3: memref<2x1024xf32, #tpu.memory_space<vmem>>, %arg4: memref<1x2x128xf32, #tpu.memory_space<vmem>>) attributes {dimension_semantics = [#tpu.dimension_semantics<parallel>, #tpu.dimension_semantics<arbitrary>], iteration_bounds = array<i64: 1, 1>, scalar_prefetch = 0 : i64, scratch_operands = 0 : i64, tpu.core_type = #tpu.core_type<tc>, window_params = [{transform_indices = @transform_0, window_bounds = array<i64: 2, 1024>}, {transform_indices = @transform_1, window_bounds = array<i64: 2, 1024>}, {transform_indices = @transform_2, window_bounds = array<i64: 1, 2, 128>}]} {
    %c0_i32 = arith.constant 0 : i32
    %0 = arith.cmpi eq, %arg1, %c0_i32 : i32
    %1 = arith.extui %0 : i1 to i32
    %c0_i32_0 = arith.constant 0 : i32
    %2 = arith.cmpi ne, %1, %c0_i32_0 : i32
    scf.if %2 {
      %cst_10 = arith.constant 0.000000e+00 : f32
      %30 = vector.broadcast %cst_10 : f32 to vector<2x128xf32>
      %c0_11 = arith.constant 0 : index
      %c0_12 = arith.constant 0 : index
      %c0_13 = arith.constant 0 : index
      %31 = vector.load %arg4[%c0_11, %c0_12, %c0_13] : memref<1x2x128xf32, #tpu.memory_space<vmem>>, vector<1x2x128xf32>
      %32 = vector.shape_cast %31 : vector<1x2x128xf32> to vector<2x128xf32>
      %33 = vector.shape_cast %30 : vector<2x128xf32> to vector<1x2x128xf32>
      tpu.vector_store %arg4[%c0_11, %c0_12, %c0_13], %33 {strides = array<i32>} : memref<1x2x128xf32, #tpu.memory_space<vmem>>, vector<1x2x128xf32>,
    } else {
    }
    %c0 = arith.constant 0 : index
    %c0_1 = arith.constant 0 : index
    %c0_2 = arith.constant 0 : index
    %3 = vector.load %arg4[%c0, %c0_1, %c0_2] : memref<1x2x128xf32, #tpu.memory_space<vmem>>, vector<1x2x128xf32>
    %4 = vector.shape_cast %3 : vector<1x2x128xf32> to vector<2x128xf32>
    %cst = arith.constant 0.000000e+00 : f32
    %5 = vector.broadcast %cst : f32 to vector<2x128xf32>
    %c0_3 = arith.constant 0 : index
    %c0_4 = arith.constant 0 : index
    %6 = vector.load %arg2[%c0_3, %c0_4] : memref<2x1024xf32, #tpu.memory_space<vmem>>, vector<2x1024xf32>
    %c0_5 = arith.constant 0 : index
    %c0_6 = arith.constant 0 : index
    %7 = vector.load %arg3[%c0_5, %c0_6] : memref<2x1024xf32, #tpu.memory_space<vmem>>, vector<2x1024xf32>
    %8 = arith.subf %6, %7 : vector<2x1024xf32>
    %9 = arith.mulf %8, %8 : vector<2x1024xf32>
    %10 = vector.extract_strided_slice %9 {offsets = [0, 0], sizes = [2, 128], strides = [1, 1]} : vector<2x1024xf32> to vector<2x128xf32>
    %11 = vector.extract_strided_slice %9 {offsets = [0, 128], sizes = [2, 128], strides = [1, 1]} : vector<2x1024xf32> to vector<2x128xf32>
    %12 = arith.addf %10, %11 : vector<2x128xf32>
    %13 = vector.extract_strided_slice %9 {offsets = [0, 256], sizes = [2, 128], strides = [1, 1]} : vector<2x1024xf32> to vector<2x128xf32>
    %14 = arith.addf %12, %13 : vector<2x128xf32>
    %15 = vector.extract_strided_slice %9 {offsets = [0, 384], sizes = [2, 128], strides = [1, 1]} : vector<2x1024xf32> to vector<2x128xf32>
    %16 = arith.addf %14, %15 : vector<2x128xf32>
    %17 = vector.extract_strided_slice %9 {offsets = [0, 512], sizes = [2, 128], strides = [1, 1]} : vector<2x1024xf32> to vector<2x128xf32>
    %18 = arith.addf %16, %17 : vector<2x128xf32>
    %19 = vector.extract_strided_slice %9 {offsets = [0, 640], sizes = [2, 128], strides = [1, 1]} : vector<2x1024xf32> to vector<2x128xf32>
    %20 = arith.addf %18, %19 : vector<2x128xf32>
    %21 = vector.extract_strided_slice %9 {offsets = [0, 768], sizes = [2, 128], strides = [1, 1]} : vector<2x1024xf32> to vector<2x128xf32>
    %22 = arith.addf %20, %21 : vector<2x128xf32>
    %23 = vector.extract_strided_slice %9 {offsets = [0, 896], sizes = [2, 128], strides = [1, 1]} : vector<2x1024xf32> to vector<2x128xf32>
    %24 = arith.addf %22, %23 : vector<2x128xf32>
    %25 = arith.addf %5, %24 : vector<2x128xf32>
    %26 = arith.addf %4, %25 : vector<2x128xf32>
    %c0_7 = arith.constant 0 : index
    %c0_8 = arith.constant 0 : index
    %c0_9 = arith.constant 0 : index
    %27 = vector.load %arg4[%c0_7, %c0_8, %c0_9] : memref<1x2x128xf32, #tpu.memory_space<vmem>>, vector<1x2x128xf32>
    %28 = vector.shape_cast %27 : vector<1x2x128xf32> to vector<2x128xf32>
    %29 = vector.shape_cast %26 : vector<2x128xf32> to vector<1x2x128xf32>
    tpu.vector_store %arg4[%c0_7, %c0_8, %c0_9], %29 {strides = array<i32>} : memref<1x2x128xf32, #tpu.memory_space<vmem>>, vector<1x2x128xf32>,
    return
  }
  func.func @transform_0(%arg0: i32, %arg1: i32) -> (i32, i32) {
    %c1_i32 = arith.constant 1 : i32
    %0 = arith.muli %arg0, %c1_i32 : i32
    %1 = arith.addi %0, %arg1 : i32
    %c0_i32 = arith.constant 0 : i32
    %2 = arith.minsi %1, %c0_i32 : i32
    %c0_i32_0 = arith.constant 0 : i32
    %c0_i32_1 = arith.constant 0 : i32
    return %c0_i32_0, %2 : i32, i32
  }
  func.func @transform_1(%arg0: i32, %arg1: i32) -> (i32, i32) {
    %c1_i32 = arith.constant 1 : i32
    %0 = arith.muli %arg0, %c1_i32 : i32
    %1 = arith.addi %0, %arg1 : i32
    %c0_i32 = arith.constant 0 : i32
    %2 = arith.minsi %1, %c0_i32 : i32
    %c0_i32_0 = arith.constant 0 : i32
    %c0_i32_1 = arith.constant 0 : i32
    return %c0_i32_0, %2 : i32, i32
  }
  func.func @transform_2(%arg0: i32, %arg1: i32) -> (i32, i32, i32) {
    %c0_i32 = arith.constant 0 : i32
    %c0_i32_0 = arith.constant 0 : i32
    %c0_i32_1 = arith.constant 0 : i32
    return %arg0, %c0_i32, %c0_i32_0 : i32, i32, i32
  }
}

</mosaic_0001>

<llo_original>
// kernel: psnr_loss.1
$region0: #{psnr_loss.1}
  #allocation0 [shape = 'u32[]', space=smem, size = 0x4, offset = 0x4, fixed_abs, tag = 'smem constant byte address 0x4 - core index']
  #allocation1 [shape = 'u32[72,128]{1,0:T(1,128)}', space=vmem, size = 0x9000, scoped, tag = 'internal scratch']
  %s0 = inlined_call_operand.vmem [shape: f32[2,1024], index: 0, kind: input, shape index: {}]
  %s1 = inlined_call_operand.vmem [shape: f32[2,1024], index: 1, kind: input, shape index: {}]
  %s2 = inlined_call_operand.vmem [shape: f32[1,2,128], index: 2, kind: output, shape index: {}]
  %s3 = sld [smem:[#allocation0]]
  $region22: #{psnr_loss.1} parent=0
    _
  %s5 = ssub.s32 1, %s3
  %s6 = scalar_select 0, %s5, %s3
  // Predicated region
  $region2: #{psnr_loss.1} parent=0 // pred_check
    _
  $region3: #{psnr_loss.1} parent=0 // pred_check_branch
    %8 = sbr.rel (0) target = $region5
  $region4: #{psnr_loss.1} parent=0 // pred_region
    %s9 = sadd.s32 0, 0
    %p10 = scmp.lt.s32.totalorder %s9, 0
    %s11 = scalar_select %p10, %s9, 0
    %s12 = smul.u32 8, %s11
    %p13 = scmp.lt.s32.totalorder %s12, 7
    %s14 = scalar_select %p13, %s12, 7
    %s15 = smul.addr %s14, 2
    %s16 = scalar_lea.vmem %s0, %s15
    %s17 = sadd.s32 0, 0
    %p18 = scmp.lt.s32.totalorder %s17, 0
    %s19 = scalar_select %p18, %s17, 0
    %s20 = smul.u32 8, %s19
  $region5: #{psnr_loss.1} parent=0 // pred_fallthru
    _
  // Predicated region
  $region6: #{psnr_loss.1} parent=0 // pred_check
    _
  $region7: #{psnr_loss.1} parent=0 // pred_check_branch
    %22 = sbr.rel (0) target = $region9
  $region8: #{psnr_loss.1} parent=0 // pred_region
    %s23 = sadd.s32 0, 0
    %p24 = scmp.lt.s32.totalorder %s23, 0
    %s25 = scalar_select %p24, %s23, 0
    %s26 = smul.u32 8, %s25
    %p27 = scmp.lt.s32.totalorder %s26, 7
    %s28 = scalar_select %p27, %s26, 7
    %s29 = smul.addr %s28, 2
    %s30 = scalar_lea.vmem %s1, %s29
    %s31 = sadd.s32 0, 0
    %p32 = scmp.lt.s32.totalorder %s31, 0
    %s33 = scalar_select %p32, %s31, 0
    %s34 = smul.u32 8, %s33
  $region9: #{psnr_loss.1} parent=0 // pred_fallthru
    _
  %s35 = sadd.s32 0, 0
  %p36 = scmp.lt.s32.totalorder %s35, 0
  %s37 = scalar_select %p36, %s35, 0
  %s38 = smul.u32 8, %s37
  %p39 = scmp.lt.s32.totalorder %s38, 7
  %s40 = scalar_select %p39, %s38, 7
  %s41 = smul.addr %s40, 2
  %s42 = scalar_lea.vmem %s0, %s41
  %s43 = sadd.s32 0, 0
  %p44 = scmp.lt.s32.totalorder %s43, 0
  %s45 = scalar_select %p44, %s43, 0
  %s46 = smul.u32 8, %s45
  %p47 = scmp.lt.s32.totalorder %s46, 7
  %s48 = scalar_select %p47, %s46, 7
  %s49 = smul.addr %s48, 2
  %s50 = scalar_lea.vmem %s1, %s49
  %s51 = sadd.s32 0, 0
  %p52 = scmp.lt.s32.totalorder %s51, 0
  %s53 = scalar_select %p52, %s51, 0
  %s54 = smul.u32 8, %s53
  %p55 = scmp.lt.s32.totalorder %s54, 7
  %s56 = scalar_select %p55, %s54, 7
  %s57 = smul.addr %s56, 2
  %s58 = scalar_lea.vmem %s0, %s57
  %s59 = sadd.s32 0, 0
  %p60 = scmp.lt.s32.totalorder %s59, 0
  %s61 = scalar_select %p60, %s59, 0
  %s62 = smul.u32 8, %s61
  %s63 = sadd.s32 0, 0
  %p64 = scmp.lt.s32.totalorder %s63, 0
  %s65 = scalar_select %p64, %s63, 0
  %s66 = smul.u32 8, %s65
  %p67 = scmp.lt.s32.totalorder %s66, 7
  %s68 = scalar_select %p67, %s66, 7
  %s69 = smul.addr %s68, 2
  %s70 = scalar_lea.vmem %s1, %s69
  %s71 = sadd.s32 0, 0
  %p72 = scmp.lt.s32.totalorder %s71, 0
  %s73 = scalar_select %p72, %s71, 0
  %s74 = smul.u32 8, %s73
  %p75 = scmp.eq.s32.totalorder 0, 0
  // Predicated region
  $region10: #{psnr_loss.1} parent=0 // pred_check
    %p76 = pneg %p75
  $region11: #{psnr_loss.1} parent=0 // pred_check_branch
    %78 = sbr.rel (%p76) target = $region13
  $region12: #{psnr_loss.1} parent=0 // pred_region
    %79 = vst [vmem:[%s2] sm:$0x3] 0.0
  $region13: #{psnr_loss.1} parent=0 // pred_fallthru
    _
  %v80 = vld [vmem:[%s2] sm:$0x3]
  %v81 = vld [vmem:[%s58] sm:$0xff]
  %v82 = vld [vmem:[%s58 + $0x8] sm:$0xff]
  %v83 = vld [vmem:[%s70] sm:$0xff]
  %v84 = vld [vmem:[%s70 + $0x8] sm:$0xff]
  %v85 = vsub.f32 %v81, %v83
  %v86 = vsub.f32 %v82, %v84
  %v87 = vmul.f32 %v85, %v85
  %v88 = vmul.f32 %v86, %v86
  %v90 = vrot.slane %v87, 2
  %v92 = vadd.f32 %v87, %v90
  %v93 = vrot.slane %v87, 4
  %v95 = vadd.f32 %v92, %v93
  %v96 = vrot.slane %v87, 6
  %v98 = vadd.f32 %v95, %v96
  %v99 = vadd.f32 %v98, %v88
  %v101 = vrot.slane %v88, 2
  %v103 = vadd.f32 %v99, %v101
  %v104 = vrot.slane %v88, 4
  %v106 = vadd.f32 %v103, %v104
  %v107 = vrot.slane %v88, 6
  %v109 = vadd.f32 %v106, %v107
  %v110 = vadd.f32 %v109, 0.0
  %v111 = vadd.f32 %v80, %v110
  %112 = vst [vmem:[%s2] sm:$0x3] %v111
  // Predicated region
  $region14: #{psnr_loss.1} parent=0 // pred_check
    _
  $region15: #{psnr_loss.1} parent=0 // pred_check_branch
    %114 = sbr.rel (0) target = $region17
  $region16: #{psnr_loss.1} parent=0 // pred_region
    _
  $region17: #{psnr_loss.1} parent=0 // pred_fallthru
    _
  // Predicated region
  $region18: #{psnr_loss.1} parent=0 // pred_check
    _
  $region19: #{psnr_loss.1} parent=0 // pred_check_branch
    %116 = sbr.rel (0) target = $region21
  $region20: #{psnr_loss.1} parent=0 // pred_region
    _
  $region21: #{psnr_loss.1} parent=0 // pred_fallthru
    _

</llo_original>
